<compile_context>
chip_gen: v5e
topology: v5e:2x2
jax: 0.10.0
libtpu: 0.0.40
codegen_flags: <defaults>
</compile_context>

<pallas_src>
import functools

import jax
import jax.numpy as jnp
from jax.experimental import pallas as pl
from jax.experimental.pallas import tpu as pltpu

LANE = 128


def _round_up(n, m):
    return ((n + m - 1) // m) * m


# --------------------------------------------------------------------------- #
# Kernel
# --------------------------------------------------------------------------- #
def mlp_kernel(x_ref, w1_ref, b1_ref, w2_ref, b2_ref, w3_ref, b3_ref, o_ref):
    """Fused Linear -> LeakyReLU -> Linear -> LeakyReLU -> Linear for one row tile."""
    cdt = w1_ref.dtype   # MXU operand dtype (bf16 or f32); accumulation is always f32
    edt = b1_ref.dtype   # epilogue dtype (bf16 on v6e/v7x bf16 path, f32 otherwise)

    # layer 1
    h1 = jnp.dot(x_ref[...], w1_ref[...], preferred_element_type=jnp.float32)
    h1 = h1.astype(edt) + b1_ref[...]
    h1 = jnp.where(h1 > 0, h1, 0.2 * h1)             # LeakyReLU(0.2)

    # layer 2
    h2 = jnp.dot(h1.astype(cdt), w2_ref[...], preferred_element_type=jnp.float32)
    h2 = h2.astype(edt) + b2_ref[...]
    h2 = jnp.where(h2 > 0, h2, 0.2 * h2)

    # layer 3 (no activation); final bias-add stays in f32
    out = jnp.dot(h2.astype(cdt), w3_ref[...], preferred_element_type=jnp.float32)
    out = out + b3_ref[...]
    o_ref[...] = out.astype(o_ref.dtype)


# --------------------------------------------------------------------------- #
# Capability / hardware queries (one-time)
# --------------------------------------------------------------------------- #
@functools.lru_cache(maxsize=None)
def _single_buffer_supported():
    """One-time probe: can this jax lower pipeline_mode=pl.Buffered(1) on TPU?"""
    if not hasattr(pl, "Buffered"):
        return False

    def probe_kernel(x_ref, w_ref, o_ref):
        o_ref[...] = x_ref[...] + w_ref[...]

    try:
        fn = pl.pallas_call(
            probe_kernel,
            out_shape=jax.ShapeDtypeStruct((16, 128), jnp.float32),
            grid_spec=pltpu.PrefetchScalarGridSpec(
                num_scalar_prefetch=0,
                grid=(2,),
                in_specs=[
                    pl.BlockSpec((8, 128), lambda i: (i, 0)),
                    pl.BlockSpec((8, 128), lambda i: (0, 0),
                                 pipeline_mode=pl.Buffered(1)),
                ],
                out_specs=pl.BlockSpec((8, 128), lambda i: (i, 0)),
            ),
        )
        jax.block_until_ready(
            fn(jnp.zeros((16, 128), jnp.float32), jnp.zeros((8, 128), jnp.float32))
        )
        return True
    except Exception:
        return False


@functools.lru_cache(maxsize=None)
def _vmem_capacity_bytes():
    try:
        return int(pltpu.get_tpu_info().vmem_capacity_bytes)
    except Exception:
        return 64 << 20  # most conservative (v7x per-TC VMEM)


@functools.lru_cache(maxsize=None)
def _device_kind():
    try:
        return jax.devices()[0].device_kind.lower()
    except Exception:
        return ""


def _default_epilogue_dtype(compute_dtype):
    """bf16 epilogue on v6e/v7x bf16 path; f32 on v5e (no native bf16 VPU) / f32 path."""
    if jnp.dtype(compute_dtype) != jnp.bfloat16:
        return jnp.float32
    kind = _device_kind()
    if any(tag in kind for tag in ("v2", "v3", "v4", "v5")):
        return jnp.float32
    return jnp.bfloat16


# --------------------------------------------------------------------------- #
# Parameter preparation (pad + cast ONCE, not per forward call)
# --------------------------------------------------------------------------- #
def prepare_params(params, *, compute_dtype=jnp.bfloat16, epilogue_dtype=None):
    """Pad/cast weights & biases once.  Weights stored [in, out], biases [1, out]."""
    cdt = jnp.dtype(compute_dtype)
    edt = jnp.dtype(_default_epilogue_dtype(cdt) if epilogue_dtype is None
                    else epilogue_dtype)
    sub = 8 if cdt.itemsize == 4 else 16  # sublane multiple for the compute dtype

    w1, b1, w2, b2, w3, b3 = (params[k] for k in ("w1", "b1", "w2", "b2", "w3", "b3"))
    ind, hdim1 = w1.shape
    hdim2, odim = w2.shape[1], w3.shape[1]

    # K of layer 1: only sublane-aligned (streamed operand; keep HBM traffic minimal).
    ind_p = _round_up(ind, sub)
    # Hidden dims: lane-dense (matmul N dims / next-layer K dims).
    h1_p = _round_up(hdim1, LANE)
    h2_p = _round_up(hdim2, LANE)
    # Small odim: keep unpadded (full-extent lane block) -> no inflated writeback,
    # no post-kernel slice.  Large odim: lane-dense multiples of 128.
    od_p = odim if odim <= LANE else _round_up(odim, LANE)

    def pad2(a, rows, cols, dtype):
        pr, pc = rows - a.shape[0], cols - a.shape[1]
        if pr or pc:
            a = jnp.pad(a, ((0, pr), (0, pc)))
        return a.astype(dtype)

    return {
        "w1": pad2(w1, ind_p, h1_p, cdt),
        "b1": pad2(b1, 1, h1_p, edt),
        "w2": pad2(w2, h1_p, h2_p, cdt),
        "b2": pad2(b2, 1, h2_p, edt),
        "w3": pad2(w3, h2_p, od_p, cdt),
        "b3": pad2(b3, 1, od_p, jnp.float32),
        "meta": dict(ind=ind, hdim1=hdim1, hdim2=hdim2, odim=odim,
                     ind_p=ind_p, h1_p=h1_p, h2_p=h2_p, od_p=od_p,
                     cdt=cdt, edt=edt, sub=sub),
    }


def _pick_bm(batch, bm, sub):
    """Row tile: big enough to fill the MXU, small enough that the grid has >=4
    steps (>=2 per TensorCore on v7x megacore) so DMA/compute overlap exists."""
    bm_eff = min(bm, _round_up(batch, sub))
    if batch >= 4 * sub:
        bm_eff = min(bm_eff, _round_up(pl.cdiv(batch, 4), sub))
    return max(sub, _round_up(bm_eff, sub))


# --------------------------------------------------------------------------- #
# Forward wrapper
# --------------------------------------------------------------------------- #
def mlp_forward(x, prepared, *, bm=256):
    """x: [batch, ind] float32.  `prepared` comes from prepare_params()."""
    meta = prepared["meta"]
    cdt, edt, sub = meta["cdt"], meta["edt"], meta["sub"]
    ind, hdim1, hdim2, odim = meta["ind"], meta["hdim1"], meta["hdim2"], meta["odim"]
    ind_p, h1_p, h2_p, od_p = meta["ind_p"], meta["h1_p"], meta["h2_p"], meta["od_p"]

    batch = x.shape[0]
    assert x.shape[1] == ind, f"expected x feature dim {ind}, got {x.shape[1]}"

    bm_eff = _pick_bm(batch, bm, sub)
    batch_p = _round_up(batch, bm_eff)
    grid = (batch_p // bm_eff,)

    # Per-call work on x only (weights are already padded/cast).
    xp = x
    if xp.shape != (batch_p, ind_p):
        xp = jnp.pad(xp, ((0, batch_p - batch), (0, ind_p - ind)))
    xp = xp.astype(cdt)

    w1p, b1p = prepared["w1"], prepared["b1"]
    w2p, b2p = prepared["w2"], prepared["b2"]
    w3p, b3p = prepared["w3"], prepared["b3"]

    single_buf = _single_buffer_supported()
    w_copies = 1 if single_buf else 2

    # ---- VMEM budget (tight resident-footprint accounting) -----------------
    out_itemsize = jnp.dtype(x.dtype).itemsize
    wbytes = w_copies * (w1p.nbytes + w2p.nbytes + w3p.nbytes)
    bbytes = w_copies * (b1p.nbytes + b2p.nbytes + b3p.nbytes)
    io_bytes = 2 * bm_eff * (ind_p * cdt.itemsize + od_p * out_itemsize)  # dbl-buffered x/out
    act_bytes = bm_eff * (h1_p + h2_p) * 4                                # f32 intermediates
    needed = wbytes + bbytes + io_bytes + act_bytes

    vmem_cap = _vmem_capacity_bytes()
    if needed > 0.7 * vmem_cap:
        # TODO(synk): when W1+W2+W3 don't fit resident (esp. v7x's 64 MiB/TC), tile each
        # layer's K/N dims with a nested pltpu.emit_pipeline instead of failing here.
        raise ValueError(
            f"MLP weights too large to stay VMEM-resident: need ~{needed >> 20} MiB, "
            f"per-core VMEM {vmem_cap >> 20} MiB")
    vmem_limit = int(min(max(needed + needed // 4 + (4 << 20), 16 << 20),
                         int(0.9 * vmem_cap)))

    # ---- Cost estimate from true (unpadded) dims ----------------------------
    flops = 2 * batch * (ind * hdim1 + hdim1 * hdim2 + hdim2 * odim)
    bytes_accessed = int(xp.nbytes + w1p.nbytes + w2p.nbytes + w3p.nbytes
                         + b1p.nbytes + b2p.nbytes + b3p.nbytes
                         + batch_p * od_p * out_itemsize)
    cost = pl.CostEstimate(flops=int(flops), transcendentals=0,
                           bytes_accessed=bytes_accessed)

    # ---- BlockSpecs ----------------------------------------------------------
    if single_buf:
        def wspec(shape):  # grid-invariant, single-buffered (resident) operand
            return pl.BlockSpec(shape, lambda i: (0, 0), pipeline_mode=pl.Buffered(1))
    else:
        def wspec(shape):
            return pl.BlockSpec(shape, lambda i: (0, 0))

    out = pl.pallas_call(
        mlp_kernel,
        out_shape=jax.ShapeDtypeStruct((batch_p, od_p), x.dtype),
        grid_spec=pltpu.PrefetchScalarGridSpec(
            num_scalar_prefetch=0,
            grid=grid,
            in_specs=[
                pl.BlockSpec((bm_eff, ind_p), lambda i: (i, 0)),  # x row tile (streamed)
                wspec((ind_p, h1_p)),                             # W1 (resident)
                wspec((1, h1_p)),                                 # b1
                wspec((h1_p, h2_p)),                              # W2
                wspec((1, h2_p)),                                 # b2
                wspec((h2_p, od_p)),                              # W3
                wspec((1, od_p)),                                 # b3
            ],
            out_specs=pl.BlockSpec((bm_eff, od_p), lambda i: (i, 0)),
        ),
        compiler_params=pltpu.CompilerParams(
            dimension_semantics=("parallel",),
            vmem_limit_bytes=vmem_limit,
        ),
        cost_estimate=cost,
    )(xp, w1p, b1p, w2p, b2p, w3p, b3p)

    if batch_p != batch or od_p != odim:
        out = out[:batch, :odim]
    return out


# --------------------------------------------------------------------------- #
# Reference + init (deterministic, mimics nn.Linear init)
# --------------------------------------------------------------------------- #
def init_params(key, ind, hdim1, hdim2, odim):
    ks = jax.random.split(key, 6)

    def lin(kw, kb, fan_in, fan_out):
        bound = 1.0 / jnp.sqrt(jnp.float32(fan_in))
        w = jax.random.uniform(kw, (fan_in, fan_out), jnp.float32, -bound, bound)
        b = jax.random.uniform(kb, (1, fan_out), jnp.float32, -bound, bound)
        return w, b

    w1, b1 = lin(ks[0], ks[1], ind, hdim1)
    w2, b2 = lin(ks[2], ks[3], hdim1, hdim2)
    w3, b3 = lin(ks[4], ks[5], hdim2, odim)
    return {"w1": w1, "b1": b1, "w2": w2, "b2": b2, "w3": w3, "b3": b3}


def mlp_ref(x, p):
    def leaky(v):
        return jnp.where(v > 0, v, 0.2 * v)
    h1 = leaky(x @ p["w1"] + p["b1"])
    h2 = leaky(h1 @ p["w2"] + p["b2"])
    return h2 @ p["w3"] + p["b3"]


if __name__ == "__main__":
    key = jax.random.PRNGKey(0)
    kx, kp = jax.random.split(key)

    # batch=256 -> 4 grid steps (>=2 per TensorCore on v7x); small feature dims.
    batch, ind, hdim1, hdim2, odim = 256, 32, 64, 48, 16
    x = jax.random.normal(kx, (batch, ind), jnp.float32)
    params = init_params(kp, ind, hdim1, hdim2, odim)
    ref = mlp_ref(x, params)

    # exact f32 operand path
    prep_f32 = prepare_params(params, compute_dtype=jnp.float32)
    out_f32 = jax.block_until_ready(mlp_forward(x, prep_f32, bm=256))
    assert out_f32.shape == (batch, odim)
    assert jnp.allclose(out_f32, ref, atol=1e-4, rtol=1e-4), "f32 mismatch vs reference"

    # default fast path: bf16 MXU operands, f32 accumulation (prepared/cached once)
    prep_bf16 = prepare_params(params)  # compute_dtype=bfloat16 default
    out_bf16 = jax.block_until_ready(mlp_forward(x, prep_bf16, bm=256))
    assert out_bf16.shape == (batch, odim)
    assert jnp.allclose(out_bf16, ref, atol=1.5e-1, rtol=5e-2), "bf16 mismatch vs reference"

    print("KERNEL_OK")
</pallas_src>

<mosaic_0001>
module attributes {stable_mosaic.version = 11 : i64} {
  func.func @probe_kernel(%arg0: i32, %arg1: memref<8x128xf32, #tpu.memory_space<vmem>>, %arg2: memref<8x128xf32, #tpu.memory_space<vmem>>, %arg3: memref<8x128xf32, #tpu.memory_space<vmem>>) attributes {dimension_semantics = [#tpu.dimension_semantics<arbitrary>], iteration_bounds = array<i64: 2>, scalar_prefetch = 0 : i64, scratch_operands = 0 : i64, tpu.core_type = #tpu.core_type<tc>, window_params = [{transform_indices = @transform_0, window_bounds = array<i64: 8, 128>}, {pipeline_mode = #tpu.pipeline_mode<synchronous>, transform_indices = @transform_1, window_bounds = array<i64: 8, 128>}, {transform_indices = @transform_2, window_bounds = array<i64: 8, 128>}]} {
    %c0 = arith.constant 0 : index
    %c0_0 = arith.constant 0 : index
    %0 = vector.load %arg1[%c0, %c0_0] : memref<8x128xf32, #tpu.memory_space<vmem>>, vector<8x128xf32>
    %c0_1 = arith.constant 0 : index
    %c0_2 = arith.constant 0 : index
    %1 = vector.load %arg2[%c0_1, %c0_2] : memref<8x128xf32, #tpu.memory_space<vmem>>, vector<8x128xf32>
    %2 = arith.addf %0, %1 : vector<8x128xf32>
    %c0_3 = arith.constant 0 : index
    %c0_4 = arith.constant 0 : index
    %3 = vector.load %arg3[%c0_3, %c0_4] : memref<8x128xf32, #tpu.memory_space<vmem>>, vector<8x128xf32>
    tpu.vector_store %arg3[%c0_3, %c0_4], %2 {strides = array<i32>} : memref<8x128xf32, #tpu.memory_space<vmem>>, vector<8x128xf32>,
    return
  }
  func.func @transform_0(%arg0: i32) -> (i32, i32) {
    %c0_i32 = arith.constant 0 : i32
    %c0_i32_0 = arith.constant 0 : i32
    return %arg0, %c0_i32 : i32, i32
  }
  func.func @transform_1(%arg0: i32) -> (i32, i32) {
    %c0_i32 = arith.constant 0 : i32
    %c0_i32_0 = arith.constant 0 : i32
    %c0_i32_1 = arith.constant 0 : i32
    return %c0_i32, %c0_i32_0 : i32, i32
  }
  func.func @transform_2(%arg0: i32) -> (i32, i32) {
    %c0_i32 = arith.constant 0 : i32
    %c0_i32_0 = arith.constant 0 : i32
    return %arg0, %c0_i32 : i32, i32
  }
}

module attributes {stable_mosaic.version = 11 : i64} {
  func.func @mlp_kernel(%arg0: i32, %arg1: memref<64x32xf32, #tpu.memory_space<vmem>>, %arg2: memref<32x128xf32, #tpu.memory_space<vmem>>, %arg3: memref<1x128xf32, #tpu.memory_space<vmem>>, %arg4: memref<128x128xf32, #tpu.memory_space<vmem>>, %arg5: memref<1x128xf32, #tpu.memory_space<vmem>>, %arg6: memref<128x16xf32, #tpu.memory_space<vmem>>, %arg7: memref<1x16xf32, #tpu.memory_space<vmem>>, %arg8: memref<64x16xf32, #tpu.memory_space<vmem>>) attributes {dimension_semantics = [#tpu.dimension_semantics<parallel>], iteration_bounds = array<i64: 4>, scalar_prefetch = 0 : i64, scratch_operands = 0 : i64, tpu.core_type = #tpu.core_type<tc>, window_params = [{transform_indices = @transform_0, window_bounds = array<i64: 64, 32>}, {pipeline_mode = #tpu.pipeline_mode<synchronous>, transform_indices = @transform_1, window_bounds = array<i64: 32, 128>}, {pipeline_mode = #tpu.pipeline_mode<synchronous>, transform_indices = @transform_2, window_bounds = array<i64: 1, 128>}, {pipeline_mode = #tpu.pipeline_mode<synchronous>, transform_indices = @transform_3, window_bounds = array<i64: 128, 128>}, {pipeline_mode = #tpu.pipeline_mode<synchronous>, transform_indices = @transform_4, window_bounds = array<i64: 1, 128>}, {pipeline_mode = #tpu.pipeline_mode<synchronous>, transform_indices = @transform_5, window_bounds = array<i64: 128, 16>}, {pipeline_mode = #tpu.pipeline_mode<synchronous>, transform_indices = @transform_6, window_bounds = array<i64: 1, 16>}, {transform_indices = @transform_7, window_bounds = array<i64: 64, 16>}]} {
    %c0 = arith.constant 0 : index
    %c0_0 = arith.constant 0 : index
    %0 = vector.load %arg1[%c0, %c0_0] : memref<64x32xf32, #tpu.memory_space<vmem>>, vector<64x32xf32>
    %c0_1 = arith.constant 0 : index
    %c0_2 = arith.constant 0 : index
    %1 = vector.load %arg2[%c0_1, %c0_2] : memref<32x128xf32, #tpu.memory_space<vmem>>, vector<32x128xf32>
    %cst = arith.constant dense<0.000000e+00> : vector<64x128xf32>
    %2 = tpu.matmul %0, %1, %cst {dimension_numbers = #tpu.dot_dimension_numbers<[1], [0], [0], [1], [0, 0, 1, 1], [], []>} : vector<64x32xf32>, vector<32x128xf32>, vector<64x128xf32> -> vector<64x128xf32>
    %c0_3 = arith.constant 0 : index
    %c0_4 = arith.constant 0 : index
    %3 = vector.load %arg3[%c0_3, %c0_4] : memref<1x128xf32, #tpu.memory_space<vmem>>, vector<1x128xf32>
    %4 = vector.broadcast %3 : vector<1x128xf32> to vector<64x128xf32>
    %5 = arith.addf %2, %4 : vector<64x128xf32>
    %cst_5 = arith.constant 0.000000e+00 : f32
    %6 = vector.broadcast %cst_5 : f32 to vector<64x128xf32>
    %7 = arith.cmpf ogt, %5, %6 : vector<64x128xf32>
    %cst_6 = arith.constant 2.000000e-01 : f32
    %8 = vector.broadcast %cst_6 : f32 to vector<64x128xf32>
    %9 = arith.mulf %8, %5 : vector<64x128xf32>
    %10 = arith.select %7, %5, %9 : vector<64x128xi1>, vector<64x128xf32>
    %c0_7 = arith.constant 0 : index
    %c0_8 = arith.constant 0 : index
    %11 = vector.load %arg4[%c0_7, %c0_8] : memref<128x128xf32, #tpu.memory_space<vmem>>, vector<128x128xf32>
    %cst_9 = arith.constant dense<0.000000e+00> : vector<64x128xf32>
    %12 = tpu.matmul %10, %11, %cst_9 {dimension_numbers = #tpu.dot_dimension_numbers<[1], [0], [0], [1], [0, 0, 1, 1], [], []>} : vector<64x128xf32>, vector<128x128xf32>, vector<64x128xf32> -> vector<64x128xf32>
    %c0_10 = arith.constant 0 : index
    %c0_11 = arith.constant 0 : index
    %13 = vector.load %arg5[%c0_10, %c0_11] : memref<1x128xf32, #tpu.memory_space<vmem>>, vector<1x128xf32>
    %14 = vector.broadcast %13 : vector<1x128xf32> to vector<64x128xf32>
    %15 = arith.addf %12, %14 : vector<64x128xf32>
    %cst_12 = arith.constant 0.000000e+00 : f32
    %16 = vector.broadcast %cst_12 : f32 to vector<64x128xf32>
    %17 = arith.cmpf ogt, %15, %16 : vector<64x128xf32>
    %cst_13 = arith.constant 2.000000e-01 : f32
    %18 = vector.broadcast %cst_13 : f32 to vector<64x128xf32>
    %19 = arith.mulf %18, %15 : vector<64x128xf32>
    %20 = arith.select %17, %15, %19 : vector<64x128xi1>, vector<64x128xf32>
    %c0_14 = arith.constant 0 : index
    %c0_15 = arith.constant 0 : index
    %21 = vector.load %arg6[%c0_14, %c0_15] : memref<128x16xf32, #tpu.memory_space<vmem>>, vector<128x16xf32>
    %cst_16 = arith.constant dense<0.000000e+00> : vector<64x16xf32>
    %22 = tpu.matmul %20, %21, %cst_16 {dimension_numbers = #tpu.dot_dimension_numbers<[1], [0], [0], [1], [0, 0, 1, 1], [], []>} : vector<64x128xf32>, vector<128x16xf32>, vector<64x16xf32> -> vector<64x16xf32>
    %c0_17 = arith.constant 0 : index
    %c0_18 = arith.constant 0 : index
    %23 = vector.load %arg7[%c0_17, %c0_18] : memref<1x16xf32, #tpu.memory_space<vmem>>, vector<1x16xf32>
    %24 = vector.broadcast %23 : vector<1x16xf32> to vector<64x16xf32>
    %25 = arith.addf %22, %24 : vector<64x16xf32>
    %c0_19 = arith.constant 0 : index
    %c0_20 = arith.constant 0 : index
    %26 = vector.load %arg8[%c0_19, %c0_20] : memref<64x16xf32, #tpu.memory_space<vmem>>, vector<64x16xf32>
    tpu.vector_store %arg8[%c0_19, %c0_20], %25 {strides = array<i32>} : memref<64x16xf32, #tpu.memory_space<vmem>>, vector<64x16xf32>,
    return
  }
  func.func @transform_0(%arg0: i32) -> (i32, i32) {
    %c0_i32 = arith.constant 0 : i32
    %c0_i32_0 = arith.constant 0 : i32
    return %arg0, %c0_i32 : i32, i32
  }
  func.func @transform_1(%arg0: i32) -> (i32, i32) {
    %c0_i32 = arith.constant 0 : i32
    %c0_i32_0 = arith.constant 0 : i32
    %c0_i32_1 = arith.constant 0 : i32
    return %c0_i32, %c0_i32_0 : i32, i32
  }
  func.func @transform_2(%arg0: i32) -> (i32, i32) {
    %c0_i32 = arith.constant 0 : i32
    %c0_i32_0 = arith.constant 0 : i32
    %c0_i32_1 = arith.constant 0 : i32
    return %c0_i32, %c0_i32_0 : i32, i32
  }
  func.func @transform_3(%arg0: i32) -> (i32, i32) {
    %c0_i32 = arith.constant 0 : i32
    %c0_i32_0 = arith.constant 0 : i32
    %c0_i32_1 = arith.constant 0 : i32
    return %c0_i32, %c0_i32_0 : i32, i32
  }
  func.func @transform_4(%arg0: i32) -> (i32, i32) {
    %c0_i32 = arith.constant 0 : i32
    %c0_i32_0 = arith.constant 0 : i32
    %c0_i32_1 = arith.constant 0 : i32
    return %c0_i32, %c0_i32_0 : i32, i32
  }
  func.func @transform_5(%arg0: i32) -> (i32, i32) {
    %c0_i32 = arith.constant 0 : i32
    %c0_i32_0 = arith.constant 0 : i32
    %c0_i32_1 = arith.constant 0 : i32
    return %c0_i32, %c0_i32_0 : i32, i32
  }
  func.func @transform_6(%arg0: i32) -> (i32, i32) {
    %c0_i32 = arith.constant 0 : i32
    %c0_i32_0 = arith.constant 0 : i32
    %c0_i32_1 = arith.constant 0 : i32
    return %c0_i32, %c0_i32_0 : i32, i32
  }
  func.func @transform_7(%arg0: i32) -> (i32, i32) {
    %c0_i32 = arith.constant 0 : i32
    %c0_i32_0 = arith.constant 0 : i32
    return %arg0, %c0_i32 : i32, i32
  }
}

</mosaic_0001>

<llo_original>
// kernel: tpu_custom_call.1
$region0: #{tpu_custom_call.1}
  #allocation0 [shape = 'u32[]', space=smem, size = 0x4, offset = 0x4, fixed_abs, tag = 'smem constant byte address 0x4 - core index']
  #allocation1 [shape = 'u32[72,128]{1,0:T(1,128)}', space=vmem, size = 0x9000, scoped, tag = 'internal scratch']
  %s0 = inlined_call_operand.hbm [shape: f32[16,128], index: 0, kind: input, shape index: {}]
  %s1 = inlined_call_operand.hbm [shape: f32[8,128], index: 1, kind: input, shape index: {}]
  %s2 = inlined_call_operand.hbm [shape: f32[16,128], index: 2, kind: output, shape index: {}]
  %s3 = sld [smem:[#allocation0]]
  $region49: #{tpu_custom_call.1} parent=0
    _
  %s5 = ssub.s32 1, %s3
  %s6 = scalar_select 0, %s5, %s3
  $region1: #{tpu_custom_call.1} parent=0
    #allocation2 [shape = 'u8[8192]{0}', space=vmem, size = 0x2000, scoped, tag = 'input window, operand 0']
    #allocation3 [shape = 's32[2]{0}', space=sflag, size = 0x8, scoped, tag = 'scoped memory for tpu_custom_call.1']
    #allocation4 [shape = 's32[2]{0}', space=sflag, size = 0x8, scoped, tag = 'scoped memory for tpu_custom_call.1']
    #allocation5 [shape = 'u8[4096]{0}', space=vmem, size = 0x1000, scoped, tag = 'input window, operand 1, single buffered']
    #allocation6 [shape = 's32[1]{0}', space=sflag, size = 0x4, scoped, tag = 'scoped memory for tpu_custom_call.1']
    #allocation7 [shape = 'u8[8192]{0}', space=vmem, size = 0x2000, scoped, tag = 'output window, operand 0']
    %7 = vsyncpa [#allocation3], 0
    %s8 = scalar_lea.sflag [#allocation3], 1
    %9 = vsyncpa %s8, 0
    %10 = vsyncpa [#allocation6], 0
    %11 = vsyncpa [#allocation4], 0
    %s12 = scalar_lea.sflag [#allocation4], 1
    %13 = vsyncpa %s12, 0
    loop: start=0, step=1, limit=4
    $region2: #{tpu_custom_call.1} parent=1 // loop_pre_header
      _
    $region3: #{tpu_custom_call.1} parent=1 // loop_header
      %s15 = sphi 0, %s19
      %p16 = scmp.ge.s32.totalorder %s15, 4
      %s25 = sphi 0, %s27
      %s28 = sphi 0, %s25
      %s29 = sphi 0, %s28
      %s45 = sphi 0, %s29
      %s49 = sphi 0, %s49
      %s51 = sphi 0, %s49
      %s52 = sphi 0, %s51
      %s66 = sphi 0, %s52
      %s72 = sphi 0, %s74
      %s75 = sphi 0, %s72
      %s76 = sphi 0, %s75
      %s92 = sphi 0, %s76
    $region4: #{tpu_custom_call.1} parent=1 // loop_header_branch
      %18 = sbr.rel (%p16) target = $region8
    $region5: #{tpu_custom_call.1} parent=1 // loop_body
      %s20 = ssub.s32 %s15, 1
      %s21 = ssub.s32 %s15, 2
      %s22 = sadd.s32 %s15, 1
      %s23 = ssub.s32 %s15, %s22
      %p24 = scmp.eq.s32.totalorder %s23, 0
      %s26 = sadd.s32 %s25, 1
      %s27 = scalar_select %p24, %s25, %s26
      %p30 = pneg %p24
      %p31 = scmp.eq.s32.totalorder %s15, 1
      %p32 = por %p30, %p31
      %p33 = scmp.ne.s32.totalorder %s25, %s28
      %p34 = scmp.eq.s32.totalorder %s15, 0
      %p35 = por %p33, %p34
      %p36 = scmp.ne.s32.totalorder %s25, %s28
      %p37 = scmp.eq.s32.totalorder %s20, 1
      %p38 = por %p36, %p37
      %p39 = scmp.ne.s32.totalorder %s28, %s29
      %p40 = scmp.eq.s32.totalorder %s20, 0
      %p41 = por %p39, %p40
      %p42 = scmp.ne.s32.totalorder %s28, %s29
      %p43 = scmp.eq.s32.totalorder %s21, 1
      %p44 = por %p42, %p43
      %p46 = scmp.ne.s32.totalorder %s29, %s45
      %p47 = scmp.eq.s32.totalorder %s21, 0
      %p48 = por %p46, %p47
      %s50 = sadd.s32 %s49, 1
      %p53 = scmp.eq.s32.totalorder %s15, 1
      %p54 = scmp.ne.s32.totalorder %s49, %s51
      %p55 = scmp.eq.s32.totalorder %s15, 0
      %p56 = por %p54, %p55
      %p57 = scmp.ne.s32.totalorder %s49, %s51
      %p58 = scmp.eq.s32.totalorder %s20, 1
      %p59 = por %p57, %p58
      %p60 = scmp.ne.s32.totalorder %s51, %s52
      %p61 = scmp.eq.s32.totalorder %s20, 0
      %p62 = por %p60, %p61
      %p63 = scmp.ne.s32.totalorder %s51, %s52
      %p64 = scmp.eq.s32.totalorder %s21, 1
      %p65 = por %p63, %p64
      %p67 = scmp.ne.s32.totalorder %s52, %s66
      %p68 = scmp.eq.s32.totalorder %s21, 0
      %p69 = por %p67, %p68
      %s70 = ssub.s32 %s15, %s22
      %p71 = scmp.eq.s32.totalorder %s70, 0
      %s73 = sadd.s32 %s72, 1
      %s74 = scalar_select %p71, %s72, %s73
      %p77 = pneg %p71
      %p78 = scmp.eq.s32.totalorder %s15, 1
      %p79 = por %p77, %p78
      %p80 = scmp.ne.s32.totalorder %s72, %s75
      %p81 = scmp.eq.s32.totalorder %s15, 0
      %p82 = por %p80, %p81
      %p83 = scmp.ne.s32.totalorder %s72, %s75
      %p84 = scmp.eq.s32.totalorder %s20, 1
      %p85 = por %p83, %p84
      %p86 = scmp.ne.s32.totalorder %s75, %s76
      %p87 = scmp.eq.s32.totalorder %s20, 0
      %p88 = por %p86, %p87
      %p89 = scmp.ne.s32.totalorder %s75, %s76
      %p90 = scmp.eq.s32.totalorder %s21, 1
      %p91 = por %p89, %p90
      %p93 = scmp.ne.s32.totalorder %s76, %s92
      %p94 = scmp.eq.s32.totalorder %s21, 0
      %p95 = por %p93, %p94
      %p96 = scmp.le.s32.totalorder 1, %s15
      %p97 = scmp.lt.s32.totalorder %s15, 3
      %p98 = pnand %p96, %p97
      %p99 = pneg %p98
      // Predicated region
      $region9: #{tpu_custom_call.1} parent=5 // pred_check
        _
      $region10: #{tpu_custom_call.1} parent=5 // pred_check_branch
        %101 = sbr.rel (%p98) target = $region12
      $region11: #{tpu_custom_call.1} parent=5 // pred_region
        %s102 = ssub.s32 %s15, 1
        // Predicated region
        $region13: #{tpu_custom_call.1} parent=11 // pred_check
          %p103 = pneg %p62
        $region14: #{tpu_custom_call.1} parent=11 // pred_check_branch
          %105 = sbr.rel (%p103) target = $region16
        $region15: #{tpu_custom_call.1} parent=11 // pred_region
          %107 = vsyncadd [#allocation6], 0
          %s109 = sshll.u32 %s1, 4
          %s110 = int_to_ptr.hbm [resolvable:$true] %s109
          %s111 = sshll.u32 [#allocation5], 4
          %s112 = int_to_ptr.vmem [resolvable:$true] %s111
          %114 = dma.hbm_to_vmem [thread:$0]  %s110, 128, %s112, [#allocation6]
        $region16: #{tpu_custom_call.1} parent=11 // pred_fallthru
          _
      $region12: #{tpu_custom_call.1} parent=5 // pred_fallthru
        _
      %p115 = scmp.lt.s32.totalorder %s15, 2
      // Predicated region
      $region17: #{tpu_custom_call.1} parent=5 // pred_check
        %p116 = pneg %p115
      $region18: #{tpu_custom_call.1} parent=5 // pred_check_branch
        %118 = sbr.rel (%p116) target = $region20
      $region19: #{tpu_custom_call.1} parent=5 // pred_region
        // Predicated region
        $region21: #{tpu_custom_call.1} parent=19 // pred_check
          %p119 = pneg %p35
        $region22: #{tpu_custom_call.1} parent=19 // pred_check_branch
          %121 = sbr.rel (%p119) target = $region24
        $region23: #{tpu_custom_call.1} parent=19 // pred_region
          %s122 = sand.u32 %s25, 1
          %s123 = scalar_lea.sflag [#allocation3], %s122
          %s124 = sand.u32 %s25, 1
          %s125 = smul.addr %s124, 8
          %s126 = scalar_lea.vmem [#allocation2], %s125
          %128 = vsyncadd %s123, 0
          %s129 = smul.addr %s15, 8
          %s130 = scalar_lea.hbm %s0, %s129
          %s132 = sshll.u32 %s130, 4
          %s133 = int_to_ptr.hbm [resolvable:$true] %s132
          %s134 = sshll.u32 %s126, 4
          %s135 = int_to_ptr.vmem [resolvable:$true] %s134
          %137 = dma.hbm_to_vmem [thread:$0]  %s133, 128, %s135, %s123
        $region24: #{tpu_custom_call.1} parent=19 // pred_fallthru
          _
      $region20: #{tpu_custom_call.1} parent=5 // pred_fallthru
        _
      %p138 = scmp.le.s32.totalorder 1, %s15
      %p139 = scmp.lt.s32.totalorder %s15, 3
      %p140 = pnand %p138, %p139
      %p141 = pneg %p140
      // Predicated region
      $region25: #{tpu_custom_call.1} parent=5 // pred_check
        _
      $region26: #{tpu_custom_call.1} parent=5 // pred_check_branch
        %143 = sbr.rel (%p140) target = $region28
      $region27: #{tpu_custom_call.1} parent=5 // pred_region
        %s144 = ssub.s32 %s15, 1
        %s145 = sand.u32 %s28, 1
        %s146 = scalar_lea.sflag [#allocation3], %s145
        %s147 = sand.u32 %s28, 1
        %s148 = smul.addr %s147, 8
        %s149 = scalar_lea.vmem [#allocation2], %s148
        // Predicated region
        $region29: #{tpu_custom_call.1} parent=27 // pred_check
          %p150 = pneg %p41
        $region30: #{tpu_custom_call.1} parent=27 // pred_check_branch
          %152 = sbr.rel (%p150) target = $region32
        $region31: #{tpu_custom_call.1} parent=27 // pred_region
          %154 = dma.done %s146, 128
        $region32: #{tpu_custom_call.1} parent=27 // pred_fallthru
          _
        // Predicated region
        $region33: #{tpu_custom_call.1} parent=27 // pred_check
          %p155 = pneg %p62
        $region34: #{tpu_custom_call.1} parent=27 // pred_check_branch
          %157 = sbr.rel (%p155) target = $region36
        $region35: #{tpu_custom_call.1} parent=27 // pred_region
          %159 = dma.done [#allocation6], 128
        $region36: #{tpu_custom_call.1} parent=27 // pred_fallthru
          _
        %s160 = sand.u32 %s28, 1
        %s161 = scalar_lea.sflag [#allocation3], %s160
        %s162 = sand.u32 %s28, 1
        %s163 = smul.addr %s162, 8
        %s164 = scalar_lea.vmem [#allocation2], %s163
        %p165 = pneg %p41
        %p166 = pneg %p38
        %p167 = pneg %p62
        %p168 = pneg %p59
        %p169 = pneg %p88
        %p170 = pneg %p85
        %s171 = sand.u32 %s75, 1
        %s172 = scalar_lea.sflag [#allocation4], %s171
        %s173 = sand.u32 %s75, 1
        %s174 = smul.addr %s173, 8
        %s175 = scalar_lea.vmem [#allocation7], %s174
        %v176 = vld [vmem:[%s149] sm:$0xff]
        %v177 = vld [vmem:[#allocation5] sm:$0xff]
        %v178 = vadd.f32 %v176, %v177
        %179 = vst [vmem:[%s175] sm:$0xff] %v178
        %s180 = sand.u32 %s75, 1
        %s181 = scalar_lea.sflag [#allocation4], %s180
        %s182 = sand.u32 %s75, 1
        %s183 = smul.addr %s182, 8
        %s184 = scalar_lea.vmem [#allocation7], %s183
        // Predicated region
        $region37: #{tpu_custom_call.1} parent=27 // pred_check
          %p185 = pneg %p85
        $region38: #{tpu_custom_call.1} parent=27 // pred_check_branch
          %187 = sbr.rel (%p185) target = $region40
        $region39: #{tpu_custom_call.1} parent=27 // pred_region
          %189 = vsyncadd %s181, 0
          %s190 = smul.addr %s20, 8
          %s191 = scalar_lea.hbm %s2, %s190
          %s193 = sshll.u32 %s184, 4
          %s194 = int_to_ptr.vmem [resolvable:$true] %s193
          %s195 = sshll.u32 %s191, 4
          %s196 = int_to_ptr.hbm [resolvable:$true] %s195
          %198 = dma.vmem_to_hbm [thread:$0]  %s194, 128, %s196, %s181
        $region40: #{tpu_custom_call.1} parent=27 // pred_fallthru
          _
      $region28: #{tpu_custom_call.1} parent=5 // pred_fallthru
        _
      %p199 = scmp.le.s32.totalorder 2, %s15
      // Predicated region
      $region41: #{tpu_custom_call.1} parent=5 // pred_check
        %p200 = pneg %p199
      $region42: #{tpu_custom_call.1} parent=5 // pred_check_branch
        %202 = sbr.rel (%p200) target = $region44
      $region43: #{tpu_custom_call.1} parent=5 // pred_region
        %s203 = ssub.s32 %s15, 2
        // Predicated region
        $region45: #{tpu_custom_call.1} parent=43 // pred_check
          %p204 = pneg %p91
        $region46: #{tpu_custom_call.1} parent=43 // pred_check_branch
          %206 = sbr.rel (%p204) target = $region48
        $region47: #{tpu_custom_call.1} parent=43 // pred_region
          %s207 = sand.u32 %s76, 1
          %s208 = scalar_lea.sflag [#allocation4], %s207
          %s209 = sand.u32 %s76, 1
          %s210 = smul.addr %s209, 8
          %s211 = scalar_lea.vmem [#allocation7], %s210
          %213 = dma.done %s208, 128
        $region48: #{tpu_custom_call.1} parent=43 // pred_fallthru
          _
      $region44: #{tpu_custom_call.1} parent=5 // pred_fallthru
        _
    $region6: #{tpu_custom_call.1} parent=1 // loop_footer
      %s19 = sadd.s32 1, %s15
    $region7: #{tpu_custom_call.1} parent=1 // loop_footer_branch
      %14 = sbr.rel target = $region3
    $region8: #{tpu_custom_call.1} parent=1 // loop_exit
      _
    %214 = vsyncpa [#allocation3], 1
    %s215 = scalar_lea.sflag [#allocation3], 1
    %216 = vsyncpa %s215, 1
    %217 = vsyncpa [#allocation6], 1
    %218 = vsyncpa [#allocation4], 1
    %s219 = scalar_lea.sflag [#allocation4], 1
    %220 = vsyncpa %s219, 1

// kernel: tpu_custom_call.1
$region0: #{tpu_custom_call.1}
  #allocation0 [shape = 'u32[]', space=smem, size = 0x4, offset = 0x4, fixed_abs, tag = 'smem constant byte address 0x4 - core index']
  #allocation1 [shape = 'u32[72,128]{1,0:T(1,128)}', space=vmem, size = 0x9000, scoped, tag = 'internal scratch']
  %s0 = inlined_call_operand.vmem [shape: f32[256,32], index: 0, kind: input, shape index: {}]
  %s1 = inlined_call_operand.vmem [shape: f32[32,128], index: 1, kind: input, shape index: {}]
  %s2 = inlined_call_operand.vmem [shape: f32[1,128], index: 2, kind: input, shape index: {}]
  %s3 = inlined_call_operand.vmem [shape: f32[128,128], index: 3, kind: input, shape index: {}]
  %s4 = inlined_call_operand.vmem [shape: f32[1,128], index: 4, kind: input, shape index: {}]
  %s5 = inlined_call_operand.vmem [shape: f32[128,16], index: 5, kind: input, shape index: {}]
  %s6 = inlined_call_operand.vmem [shape: f32[1,16], index: 6, kind: input, shape index: {}]
  %s7 = inlined_call_operand.vmem [shape: f32[256,16], index: 7, kind: output, shape index: {}]
  %s8 = sld [smem:[#allocation0]]
  $region61: #{tpu_custom_call.1} parent=0
    _
  %s10 = ssub.s32 1, %s8
  %s11 = scalar_select 0, %s10, %s8
  loop: start=0, step=1, limit=6
  $region2: #{tpu_custom_call.1} parent=0 // loop_pre_header
    _
  $region3: #{tpu_custom_call.1} parent=0 // loop_header
    %s13 = sphi 0, %s17
    %p14 = scmp.ge.s32.totalorder %s13, 6
    %s23 = sphi 0, %s25
    %s26 = sphi 0, %s23
    %s27 = sphi 0, %s26
    %s43 = sphi 0, %s27
    %s47 = sphi 0, %s47
    %s49 = sphi 0, %s47
    %s50 = sphi 0, %s49
    %s64 = sphi 0, %s50
    %s68 = sphi 0, %s68
    %s70 = sphi 0, %s68
    %s71 = sphi 0, %s70
    %s85 = sphi 0, %s71
    %s89 = sphi 0, %s89
    %s91 = sphi 0, %s89
    %s92 = sphi 0, %s91
    %s106 = sphi 0, %s92
    %s110 = sphi 0, %s110
    %s112 = sphi 0, %s110
    %s113 = sphi 0, %s112
    %s127 = sphi 0, %s113
    %s131 = sphi 0, %s131
    %s133 = sphi 0, %s131
    %s134 = sphi 0, %s133
    %s148 = sphi 0, %s134
    %s152 = sphi 0, %s152
    %s154 = sphi 0, %s152
    %s155 = sphi 0, %s154
    %s169 = sphi 0, %s155
    %s175 = sphi 0, %s177
    %s178 = sphi 0, %s175
    %s179 = sphi 0, %s178
    %s195 = sphi 0, %s179
  $region4: #{tpu_custom_call.1} parent=0 // loop_header_branch
    %16 = sbr.rel (%p14) target = $region8
  $region5: #{tpu_custom_call.1} parent=0 // loop_body
    %s18 = ssub.s32 %s13, 1
    %s19 = ssub.s32 %s13, 2
    %s20 = sadd.s32 %s13, 1
    %s21 = ssub.s32 %s13, %s20
    %p22 = scmp.eq.s32.totalorder %s21, 0
    %s24 = sadd.s32 %s23, 1
    %s25 = scalar_select %p22, %s23, %s24
    %p28 = pneg %p22
    %p29 = scmp.eq.s32.totalorder %s13, 3
    %p30 = por %p28, %p29
    %p31 = scmp.ne.s32.totalorder %s23, %s26
    %p32 = scmp.eq.s32.totalorder %s13, 0
    %p33 = por %p31, %p32
    %p34 = scmp.ne.s32.totalorder %s23, %s26
    %p35 = scmp.eq.s32.totalorder %s18, 3
    %p36 = por %p34, %p35
    %p37 = scmp.ne.s32.totalorder %s26, %s27
    %p38 = scmp.eq.s32.totalorder %s18, 0
    %p39 = por %p37, %p38
    %p40 = scmp.ne.s32.totalorder %s26, %s27
    %p41 = scmp.eq.s32.totalorder %s19, 3
    %p42 = por %p40, %p41
    %p44 = scmp.ne.s32.totalorder %s27, %s43
    %p45 = scmp.eq.s32.totalorder %s19, 0
    %p46 = por %p44, %p45
    %s48 = sadd.s32 %s47, 1
    %p51 = scmp.eq.s32.totalorder %s13, 3
    %p52 = scmp.ne.s32.totalorder %s47, %s49
    %p53 = scmp.eq.s32.totalorder %s13, 0
    %p54 = por %p52, %p53
    %p55 = scmp.ne.s32.totalorder %s47, %s49
    %p56 = scmp.eq.s32.totalorder %s18, 3
    %p57 = por %p55, %p56
    %p58 = scmp.ne.s32.totalorder %s49, %s50
    %p59 = scmp.eq.s32.totalorder %s18, 0
    %p60 = por %p58, %p59
    %p61 = scmp.ne.s32.totalorder %s49, %s50
    %p62 = scmp.eq.s32.totalorder %s19, 3
    %p63 = por %p61, %p62
    %p65 = scmp.ne.s32.totalorder %s50, %s64
    %p66 = scmp.eq.s32.totalorder %s19, 0
    %p67 = por %p65, %p66
    %s69 = sadd.s32 %s68, 1
    %p72 = scmp.eq.s32.totalorder %s13, 3
    %p73 = scmp.ne.s32.totalorder %s68, %s70
    %p74 = scmp.eq.s32.totalorder %s13, 0
    %p75 = por %p73, %p74
    %p76 = scmp.ne.s32.totalorder %s68, %s70
    %p77 = scmp.eq.s32.totalorder %s18, 3
    %p78 = por %p76, %p77
    %p79 = scmp.ne.s32.totalorder %s70, %s71
    %p80 = scmp.eq.s32.totalorder %s18, 0
    %p81 = por %p79, %p80
    %p82 = scmp.ne.s32.totalorder %s70, %s71
    %p83 = scmp.eq.s32.totalorder %s19, 3
    %p84 = por %p82, %p83
    %p86 = scmp.ne.s32.totalorder %s71, %s85
    %p87 = scmp.eq.s32.totalorder %s19, 0
    %p88 = por %p86, %p87
    %s90 = sadd.s32 %s89, 1
    %p93 = scmp.eq.s32.totalorder %s13, 3
    %p94 = scmp.ne.s32.totalorder %s89, %s91
    %p95 = scmp.eq.s32.totalorder %s13, 0
    %p96 = por %p94, %p95
    %p97 = scmp.ne.s32.totalorder %s89, %s91
    %p98 = scmp.eq.s32.totalorder %s18, 3
    %p99 = por %p97, %p98
    %p100 = scmp.ne.s32.totalorder %s91, %s92
    %p101 = scmp.eq.s32.totalorder %s18, 0
    %p102 = por %p100, %p101
    %p103 = scmp.ne.s32.totalorder %s91, %s92
    %p104 = scmp.eq.s32.totalorder %s19, 3
    %p105 = por %p103, %p104
    %p107 = scmp.ne.s32.totalorder %s92, %s106
    %p108 = scmp.eq.s32.totalorder %s19, 0
    %p109 = por %p107, %p108
    %s111 = sadd.s32 %s110, 1
    %p114 = scmp.eq.s32.totalorder %s13, 3
    %p115 = scmp.ne.s32.totalorder %s110, %s112
    %p116 = scmp.eq.s32.totalorder %s13, 0
    %p117 = por %p115, %p116
    %p118 = scmp.ne.s32.totalorder %s110, %s112
    %p119 = scmp.eq.s32.totalorder %s18, 3
    %p120 = por %p118, %p119
    %p121 = scmp.ne.s32.totalorder %s112, %s113
    %p122 = scmp.eq.s32.totalorder %s18, 0
    %p123 = por %p121, %p122
    %p124 = scmp.ne.s32.totalorder %s112, %s113
    %p125 = scmp.eq.s32.totalorder %s19, 3
    %p126 = por %p124, %p125
    %p128 = scmp.ne.s32.totalorder %s113, %s127
    %p129 = scmp.eq.s32.totalorder %s19, 0
    %p130 = por %p128, %p129
    %s132 = sadd.s32 %s131, 1
    %p135 = scmp.eq.s32.totalorder %s13, 3
    %p136 = scmp.ne.s32.totalorder %s131, %s133
    %p137 = scmp.eq.s32.totalorder %s13, 0
    %p138 = por %p136, %p137
    %p139 = scmp.ne.s32.totalorder %s131, %s133
    %p140 = scmp.eq.s32.totalorder %s18, 3
    %p141 = por %p139, %p140
    %p142 = scmp.ne.s32.totalorder %s133, %s134
    %p143 = scmp.eq.s32.totalorder %s18, 0
    %p144 = por %p142, %p143
    %p145 = scmp.ne.s32.totalorder %s133, %s134
    %p146 = scmp.eq.s32.totalorder %s19, 3
    %p147 = por %p145, %p146
    %p149 = scmp.ne.s32.totalorder %s134, %s148
    %p150 = scmp.eq.s32.totalorder %s19, 0
    %p151 = por %p149, %p150
    %s153 = sadd.s32 %s152, 1
    %p156 = scmp.eq.s32.totalorder %s13, 3
    %p157 = scmp.ne.s32.totalorder %s152, %s154
    %p158 = scmp.eq.s32.totalorder %s13, 0
    %p159 = por %p157, %p158
    %p160 = scmp.ne.s32.totalorder %s152, %s154
    %p161 = scmp.eq.s32.totalorder %s18, 3
    %p162 = por %p160, %p161
    %p163 = scmp.ne.s32.totalorder %s154, %s155
    %p164 = scmp.eq.s32.totalorder %s18, 0
    %p165 = por %p163, %p164
    %p166 = scmp.ne.s32.totalorder %s154, %s155
    %p167 = scmp.eq.s32.totalorder %s19, 3
    %p168 = por %p166, %p167
    %p170 = scmp.ne.s32.totalorder %s155, %s169
    %p171 = scmp.eq.s32.totalorder %s19, 0
    %p172 = por %p170, %p171
    %s173 = ssub.s32 %s13, %s20
    %p174 = scmp.eq.s32.totalorder %s173, 0
    %s176 = sadd.s32 %s175, 1
    %s177 = scalar_select %p174, %s175, %s176
    %p180 = pneg %p174
    %p181 = scmp.eq.s32.totalorder %s13, 3
    %p182 = por %p180, %p181
    %p183 = scmp.ne.s32.totalorder %s175, %s178
    %p184 = scmp.eq.s32.totalorder %s13, 0
    %p185 = por %p183, %p184
    %p186 = scmp.ne.s32.totalorder %s175, %s178
    %p187 = scmp.eq.s32.totalorder %s18, 3
    %p188 = por %p186, %p187
    %p189 = scmp.ne.s32.totalorder %s178, %s179
    %p190 = scmp.eq.s32.totalorder %s18, 0
    %p191 = por %p189, %p190
    %p192 = scmp.ne.s32.totalorder %s178, %s179
    %p193 = scmp.eq.s32.totalorder %s19, 3
    %p194 = por %p192, %p193
    %p196 = scmp.ne.s32.totalorder %s179, %s195
    %p197 = scmp.eq.s32.totalorder %s19, 0
    %p198 = por %p196, %p197
    %p199 = scmp.le.s32.totalorder 1, %s13
    %p200 = scmp.lt.s32.totalorder %s13, 5
    %p201 = pnand %p199, %p200
    %p202 = pneg %p201
    // Predicated region
    $region9: #{tpu_custom_call.1} parent=5 // pred_check
      _
    $region10: #{tpu_custom_call.1} parent=5 // pred_check_branch
      %204 = sbr.rel (%p201) target = $region12
    $region11: #{tpu_custom_call.1} parent=5 // pred_region
      %s205 = ssub.s32 %s13, 1
      // Predicated region
      $region13: #{tpu_custom_call.1} parent=11 // pred_check
        %p206 = pneg %p60
      $region14: #{tpu_custom_call.1} parent=11 // pred_check_branch
        %208 = sbr.rel (%p206) target = $region16
      $region15: #{tpu_custom_call.1} parent=11 // pred_region
        _
      $region16: #{tpu_custom_call.1} parent=11 // pred_fallthru
        _
      // Predicated region
      $region17: #{tpu_custom_call.1} parent=11 // pred_check
        %p209 = pneg %p81
      $region18: #{tpu_custom_call.1} parent=11 // pred_check_branch
        %211 = sbr.rel (%p209) target = $region20
      $region19: #{tpu_custom_call.1} parent=11 // pred_region
        _
      $region20: #{tpu_custom_call.1} parent=11 // pred_fallthru
        _
      // Predicated region
      $region21: #{tpu_custom_call.1} parent=11 // pred_check
        %p212 = pneg %p102
      $region22: #{tpu_custom_call.1} parent=11 // pred_check_branch
        %214 = sbr.rel (%p212) target = $region24
      $region23: #{tpu_custom_call.1} parent=11 // pred_region
        _
      $region24: #{tpu_custom_call.1} parent=11 // pred_fallthru
        _
      // Predicated region
      $region25: #{tpu_custom_call.1} parent=11 // pred_check
        %p215 = pneg %p123
      $region26: #{tpu_custom_call.1} parent=11 // pred_check_branch
        %217 = sbr.rel (%p215) target = $region28
      $region27: #{tpu_custom_call.1} parent=11 // pred_region
        _
      $region28: #{tpu_custom_call.1} parent=11 // pred_fallthru
        _
      // Predicated region
      $region29: #{tpu_custom_call.1} parent=11 // pred_check
        %p218 = pneg %p144
      $region30: #{tpu_custom_call.1} parent=11 // pred_check_branch
        %220 = sbr.rel (%p218) target = $region32
      $region31: #{tpu_custom_call.1} parent=11 // pred_region
        _
      $region32: #{tpu_custom_call.1} parent=11 // pred_fallthru
        _
      // Predicated region
      $region33: #{tpu_custom_call.1} parent=11 // pred_check
        %p221 = pneg %p165
      $region34: #{tpu_custom_call.1} parent=11 // pred_check_branch
        %223 = sbr.rel (%p221) target = $region36
      $region35: #{tpu_custom_call.1} parent=11 // pred_region
        _
      $region36: #{tpu_custom_call.1} parent=11 // pred_fallthru
        _
    $region12: #{tpu_custom_call.1} parent=5 // pred_fallthru
      _
    %p224 = scmp.lt.s32.totalorder %s13, 4
    // Predicated region
    $region37: #{tpu_custom_call.1} parent=5 // pred_check
      %p225 = pneg %p224
    $region38: #{tpu_custom_call.1} parent=5 // pred_check_branch
      %227 = sbr.rel (%p225) target = $region40
    $region39: #{tpu_custom_call.1} parent=5 // pred_region
      // Predicated region
      $region41: #{tpu_custom_call.1} parent=39 // pred_check
        %p228 = pneg %p33
      $region42: #{tpu_custom_call.1} parent=39 // pred_check_branch
        %230 = sbr.rel (%p228) target = $region44
      $region43: #{tpu_custom_call.1} parent=39 // pred_region
        %s231 = smul.u32 8, %s13
        %p232 = scmp.lt.s32.totalorder %s231, 31
        %s233 = scalar_select %p232, %s231, 31
        %s234 = smul.addr %s233, 8
        %s235 = scalar_lea.vmem %s0, %s234
        %s236 = smul.u32 8, %s13
      $region44: #{tpu_custom_call.1} parent=39 // pred_fallthru
        _
    $region40: #{tpu_custom_call.1} parent=5 // pred_fallthru
      _
    %p237 = scmp.le.s32.totalorder 1, %s13
    %p238 = scmp.lt.s32.totalorder %s13, 5
    %p239 = pnand %p237, %p238
    %p240 = pneg %p239
    // Predicated region
    $region45: #{tpu_custom_call.1} parent=5 // pred_check
      _
    $region46: #{tpu_custom_call.1} parent=5 // pred_check_branch
      %242 = sbr.rel (%p239) target = $region48
    $region47: #{tpu_custom_call.1} parent=5 // pred_region
      %s243 = ssub.s32 %s13, 1
      %s244 = smul.u32 8, %s18
      %p245 = scmp.lt.s32.totalorder %s244, 31
      %s246 = scalar_select %p245, %s244, 31
      %s247 = smul.addr %s246, 8
      %s248 = scalar_lea.vmem %s0, %s247
      %p249 = pneg %p39
      %p250 = pneg %p36
      %p251 = pneg %p60
      %p252 = pneg %p57
      %p253 = pneg %p81
      %p254 = pneg %p78
      %p255 = pneg %p102
      %p256 = pneg %p99
      %p257 = pneg %p123
      %p258 = pneg %p120
      %p259 = pneg %p144
      %p260 = pneg %p141
      %p261 = pneg %p165
      %p262 = pneg %p162
      %p263 = pneg %p191
      %p264 = pneg %p188
      %s265 = smul.u32 8, %s18
      %p266 = scmp.lt.s32.totalorder %s265, 31
      %s267 = scalar_select %p266, %s265, 31
      %s268 = smul.addr %s267, 8
      %s269 = scalar_lea.vmem %s7, %s268
      %s270 = smul.u32 8, %s18
      %p271 = scmp.lt.s32.totalorder %s270, 31
      %s272 = scalar_select %p271, %s270, 31
      %s273 = smul.addr %s272, 8
      %s274 = scalar_lea.vmem %s0, %s273
      %s275 = smul.u32 8, %s18
      %s276 = smul.u32 8, %s18
      %p277 = scmp.lt.s32.totalorder %s276, 31
      %s278 = scalar_select %p277, %s276, 31
      %s279 = smul.addr %s278, 8
      %s280 = scalar_lea.vmem %s7, %s279
      %s281 = smul.u32 8, %s18
      %v282 = vld [vmem:[%s274] sm:$0xff]
      %v283 = vld [vmem:[%s274 + $0x8] sm:$0xff]
      %v284 = vld [vmem:[%s274 + $0x10] sm:$0xff]
      %v285 = vld [vmem:[%s274 + $0x18] sm:$0xff]
      %v286 = vld [vmem:[%s274 + $0x20] sm:$0xff]
      %v287 = vld [vmem:[%s274 + $0x28] sm:$0xff]
      %v288 = vld [vmem:[%s274 + $0x30] sm:$0xff]
      %v289 = vld [vmem:[%s274 + $0x38] sm:$0xff]
      %v290 = vld [vmem:[%s1] sm:$0xff]
      %v291 = vld [vmem:[%s1 + $0x8] sm:$0xff]
      %v292 = vld [vmem:[%s1 + $0x10] sm:$0xff]
      %v293 = vld [vmem:[%s1 + $0x18] sm:$0xff]
      %v294 = vld [vmem:[%s2] sm:$0x1]
      %v296 = vperm.slane %v294, 0
      %vm298 = vcmask 261120
      %v300 = vsel %vm298, %v282, 0
      %v303 = vsel %vm298, %v283, 0
      %v306 = vsel %vm298, %v284, 0
      %v309 = vsel %vm298, %v285, 0
      %v312 = vsel %vm298, %v286, 0
      %v315 = vsel %vm298, %v287, 0
      %v318 = vsel %vm298, %v288, 0
      %v321 = vsel %vm298, %v289, 0
      %323 = vmatpush.msra.mxu0 0.0
      %324 = vmatpush.msra.mxu0 0.0
      %325 = vmatpush.msra.mxu0 0.0
      %326 = vmatpush.msra.mxu0 0.0
      %327 = vmatpush.msra.mxu0 0.0
      %328 = vmatpush.msra.mxu0 0.0
      %329 = vmatpush.msra.mxu0 0.0
      %330 = vmatpush.msra.mxu0 0.0
      %331 = vmatpush.msra.mxu0 0.0
      %332 = vmatpush.msra.mxu0 0.0
      %333 = vmatpush.msra.mxu0 0.0
      %334 = vmatpush.msra.mxu0 0.0
      %335 = vmatpush.msra.mxu0 %v293
      %336 = vmatpush.msra.mxu0 %v292
      %337 = vmatpush.msra.mxu0 %v291
      %338 = vmatpush.msra.mxu0 %v290
      %339 = vmatmul.f32.gmra.mxu0 %v300
      %v340 = vpop.f32.mrf.mxu0
      %v341 = vadd.f32 %v296, %v340
      %342 = vmatmul.f32.gmra.mxu0 %v303
      %v343 = vpop.f32.mrf.mxu0
      %v344 = vadd.f32 %v296, %v343
      %345 = vmatmul.f32.gmra.mxu0 %v306
      %v346 = vpop.f32.mrf.mxu0
      %v347 = vadd.f32 %v296, %v346
      %348 = vmatmul.f32.gmra.mxu0 %v309
      %v349 = vpop.f32.mrf.mxu0
      %v350 = vadd.f32 %v296, %v349
      %351 = vmatmul.f32.gmra.mxu0 %v312
      %v352 = vpop.f32.mrf.mxu0
      %v353 = vadd.f32 %v296, %v352
      %354 = vmatmul.f32.gmra.mxu0 %v315
      %v355 = vpop.f32.mrf.mxu0
      %v356 = vadd.f32 %v296, %v355
      %357 = vmatmul.f32.gmra.mxu0 %v318
      %v358 = vpop.f32.mrf.mxu0
      %v359 = vadd.f32 %v296, %v358
      %360 = vmatmul.f32.gmra.mxu0 %v321
      %v361 = vpop.f32.mrf.mxu0
      %v362 = vadd.f32 %v296, %v361
      %363 = vdwg.mxu0
      %vm364 = vcmp.gt.f32.partialorder %v341, 0.0
      %vm365 = vcmp.gt.f32.partialorder %v344, 0.0
      %vm366 = vcmp.gt.f32.partialorder %v347, 0.0
      %vm367 = vcmp.gt.f32.partialorder %v350, 0.0
      %vm368 = vcmp.gt.f32.partialorder %v353, 0.0
      %vm369 = vcmp.gt.f32.partialorder %v356, 0.0
      %vm370 = vcmp.gt.f32.partialorder %v359, 0.0
      %vm371 = vcmp.gt.f32.partialorder %v362, 0.0
      %v372 = vmul.f32 %v341, 0.2
      %v373 = vmul.f32 %v344, 0.2
      %v374 = vmul.f32 %v347, 0.2
      %v375 = vmul.f32 %v350, 0.2
      %v376 = vmul.f32 %v353, 0.2
      %v377 = vmul.f32 %v356, 0.2
      %v378 = vmul.f32 %v359, 0.2
      %v379 = vmul.f32 %v362, 0.2
      %v380 = vsel %vm364, %v341, %v372
      %v381 = vsel %vm365, %v344, %v373
      %v382 = vsel %vm366, %v347, %v374
      %v383 = vsel %vm367, %v350, %v375
      %v384 = vsel %vm368, %v353, %v376
      %v385 = vsel %vm369, %v356, %v377
      %v386 = vsel %vm370, %v359, %v378
      %v387 = vsel %vm371, %v362, %v379
      %v388 = vld [vmem:[%s3] sm:$0xff]
      %v389 = vld [vmem:[%s3 + $0x8] sm:$0xff]
      %v390 = vld [vmem:[%s3 + $0x10] sm:$0xff]
      %v391 = vld [vmem:[%s3 + $0x18] sm:$0xff]
      %v392 = vld [vmem:[%s3 + $0x20] sm:$0xff]
      %v393 = vld [vmem:[%s3 + $0x28] sm:$0xff]
      %v394 = vld [vmem:[%s3 + $0x30] sm:$0xff]
      %v395 = vld [vmem:[%s3 + $0x38] sm:$0xff]
      %v396 = vld [vmem:[%s3 + $0x40] sm:$0xff]
      %v397 = vld [vmem:[%s3 + $0x48] sm:$0xff]
      %v398 = vld [vmem:[%s3 + $0x50] sm:$0xff]
      %v399 = vld [vmem:[%s3 + $0x58] sm:$0xff]
      %v400 = vld [vmem:[%s3 + $0x60] sm:$0xff]
      %v401 = vld [vmem:[%s3 + $0x68] sm:$0xff]
      %v402 = vld [vmem:[%s3 + $0x70] sm:$0xff]
      %v403 = vld [vmem:[%s3 + $0x78] sm:$0xff]
      %v404 = vld [vmem:[%s4] sm:$0x1]
      %v406 = vperm.slane %v404, 0
      %408 = vmatpush.msra.mxu0 %v403
      %409 = vmatpush.msra.mxu0 %v402
      %410 = vmatpush.msra.mxu0 %v401
      %411 = vmatpush.msra.mxu0 %v400
      %412 = vmatpush.msra.mxu0 %v399
      %413 = vmatpush.msra.mxu0 %v398
      %414 = vmatpush.msra.mxu0 %v397
      %415 = vmatpush.msra.mxu0 %v396
      %416 = vmatpush.msra.mxu0 %v395
      %417 = vmatpush.msra.mxu0 %v394
      %418 = vmatpush.msra.mxu0 %v393
      %419 = vmatpush.msra.mxu0 %v392
      %420 = vmatpush.msra.mxu0 %v391
      %421 = vmatpush.msra.mxu0 %v390
      %422 = vmatpush.msra.mxu0 %v389
      %423 = vmatpush.msra.mxu0 %v388
      %424 = vmatmul.f32.gmra.mxu0 %v380
      %v425 = vpop.f32.mrf.mxu0
      %v426 = vadd.f32 %v406, %v425
      %427 = vmatmul.f32.gmra.mxu0 %v381
      %v428 = vpop.f32.mrf.mxu0
      %v429 = vadd.f32 %v406, %v428
      %430 = vmatmul.f32.gmra.mxu0 %v382
      %v431 = vpop.f32.mrf.mxu0
      %v432 = vadd.f32 %v406, %v431
      %433 = vmatmul.f32.gmra.mxu0 %v383
      %v434 = vpop.f32.mrf.mxu0
      %v435 = vadd.f32 %v406, %v434
      %436 = vmatmul.f32.gmra.mxu0 %v384
      %v437 = vpop.f32.mrf.mxu0
      %v438 = vadd.f32 %v406, %v437
      %439 = vmatmul.f32.gmra.mxu0 %v385
      %v440 = vpop.f32.mrf.mxu0
      %v441 = vadd.f32 %v406, %v440
      %442 = vmatmul.f32.gmra.mxu0 %v386
      %v443 = vpop.f32.mrf.mxu0
      %v444 = vadd.f32 %v406, %v443
      %445 = vmatmul.f32.gmra.mxu0 %v387
      %v446 = vpop.f32.mrf.mxu0
      %v447 = vadd.f32 %v406, %v446
      %448 = vdwg.mxu0
      %vm449 = vcmp.gt.f32.partialorder %v426, 0.0
      %vm450 = vcmp.gt.f32.partialorder %v429, 0.0
      %vm451 = vcmp.gt.f32.partialorder %v432, 0.0
      %vm452 = vcmp.gt.f32.partialorder %v435, 0.0
      %vm453 = vcmp.gt.f32.partialorder %v438, 0.0
      %vm454 = vcmp.gt.f32.partialorder %v441, 0.0
      %vm455 = vcmp.gt.f32.partialorder %v444, 0.0
      %vm456 = vcmp.gt.f32.partialorder %v447, 0.0
      %v457 = vmul.f32 %v426, 0.2
      %v458 = vmul.f32 %v429, 0.2
      %v459 = vmul.f32 %v432, 0.2
      %v460 = vmul.f32 %v435, 0.2
      %v461 = vmul.f32 %v438, 0.2
      %v462 = vmul.f32 %v441, 0.2
      %v463 = vmul.f32 %v444, 0.2
      %v464 = vmul.f32 %v447, 0.2
      %v465 = vsel %vm449, %v426, %v457
      %v466 = vsel %vm450, %v429, %v458
      %v467 = vsel %vm451, %v432, %v459
      %v468 = vsel %vm452, %v435, %v460
      %v469 = vsel %vm453, %v438, %v461
      %v470 = vsel %vm454, %v441, %v462
      %v471 = vsel %vm455, %v444, %v463
      %v472 = vsel %vm456, %v447, %v464
      %v473 = vld [vmem:[%s5] sm:$0xff]
      %v474 = vld [vmem:[%s5 + $0x8] sm:$0xff]
      %v475 = vld [vmem:[%s5 + $0x10] sm:$0xff]
      %v476 = vld [vmem:[%s5 + $0x18] sm:$0xff]
      %v477 = vld [vmem:[%s5 + $0x20] sm:$0xff]
      %v478 = vld [vmem:[%s5 + $0x28] sm:$0xff]
      %v479 = vld [vmem:[%s5 + $0x30] sm:$0xff]
      %v480 = vld [vmem:[%s5 + $0x38] sm:$0xff]
      %v481 = vld [vmem:[%s5 + $0x40] sm:$0xff]
      %v482 = vld [vmem:[%s5 + $0x48] sm:$0xff]
      %v483 = vld [vmem:[%s5 + $0x50] sm:$0xff]
      %v484 = vld [vmem:[%s5 + $0x58] sm:$0xff]
      %v485 = vld [vmem:[%s5 + $0x60] sm:$0xff]
      %v486 = vld [vmem:[%s5 + $0x68] sm:$0xff]
      %v487 = vld [vmem:[%s5 + $0x70] sm:$0xff]
      %v488 = vld [vmem:[%s5 + $0x78] sm:$0xff]
      %v489 = vld [vmem:[%s6] sm:$0x1]
      %v491 = vperm.slane %v489, 0
      %493 = vmatpush.msra.mxu0 %v488
      %494 = vmatpush.msra.mxu0 %v487
      %495 = vmatpush.msra.mxu0 %v486
      %496 = vmatpush.msra.mxu0 %v485
      %497 = vmatpush.msra.mxu0 %v484
      %498 = vmatpush.msra.mxu0 %v483
      %499 = vmatpush.msra.mxu0 %v482
      %500 = vmatpush.msra.mxu0 %v481
      %501 = vmatpush.msra.mxu0 %v480
      %502 = vmatpush.msra.mxu0 %v479
      %503 = vmatpush.msra.mxu0 %v478
      %504 = vmatpush.msra.mxu0 %v477
      %505 = vmatpush.msra.mxu0 %v476
      %506 = vmatpush.msra.mxu0 %v475
      %507 = vmatpush.msra.mxu0 %v474
      %508 = vmatpush.msra.mxu0 %v473
      %509 = vmatmul.f32.gmra.mxu0 %v465
      %v510 = vpop.f32.mrf.mxu0
      %v511 = vadd.f32 %v491, %v510
      %512 = vmatmul.f32.gmra.mxu0 %v466
      %v513 = vpop.f32.mrf.mxu0
      %v514 = vadd.f32 %v491, %v513
      %515 = vmatmul.f32.gmra.mxu0 %v467
      %v516 = vpop.f32.mrf.mxu0
      %v517 = vadd.f32 %v491, %v516
      %518 = vmatmul.f32.gmra.mxu0 %v468
      %v519 = vpop.f32.mrf.mxu0
      %v520 = vadd.f32 %v491, %v519
      %521 = vmatmul.f32.gmra.mxu0 %v469
      %v522 = vpop.f32.mrf.mxu0
      %v523 = vadd.f32 %v491, %v522
      %524 = vmatmul.f32.gmra.mxu0 %v470
      %v525 = vpop.f32.mrf.mxu0
      %v526 = vadd.f32 %v491, %v525
      %527 = vmatmul.f32.gmra.mxu0 %v471
      %v528 = vpop.f32.mrf.mxu0
      %v529 = vadd.f32 %v491, %v528
      %530 = vmatmul.f32.gmra.mxu0 %v472
      %v531 = vpop.f32.mrf.mxu0
      %v532 = vadd.f32 %v491, %v531
      %533 = vdwg.mxu0
      %vm534 = vcmask 130048
      %535 = vst.msk [vmem:[%s280] sm:$0xff] %vm534, %v511
      %536 = vst.msk [vmem:[%s280 + $0x8] sm:$0xff] %vm534, %v514
      %537 = vst.msk [vmem:[%s280 + $0x10] sm:$0xff] %vm534, %v517
      %538 = vst.msk [vmem:[%s280 + $0x18] sm:$0xff] %vm534, %v520
      %539 = vst.msk [vmem:[%s280 + $0x20] sm:$0xff] %vm534, %v523
      %540 = vst.msk [vmem:[%s280 + $0x28] sm:$0xff] %vm534, %v526
      %541 = vst.msk [vmem:[%s280 + $0x30] sm:$0xff] %vm534, %v529
      %542 = vst.msk [vmem:[%s280 + $0x38] sm:$0xff] %vm534, %v532
      %s543 = smul.u32 8, %s18
      %p544 = scmp.lt.s32.totalorder %s543, 31
      %s545 = scalar_select %p544, %s543, 31
      %s546 = smul.addr %s545, 8
      %s547 = scalar_lea.vmem %s7, %s546
      // Predicated region
      $region49: #{tpu_custom_call.1} parent=47 // pred_check
        %p548 = pneg %p188
      $region50: #{tpu_custom_call.1} parent=47 // pred_check_branch
        %550 = sbr.rel (%p548) target = $region52
      $region51: #{tpu_custom_call.1} parent=47 // pred_region
        %s551 = smul.u32 8, %s18
      $region52: #{tpu_custom_call.1} parent=47 // pred_fallthru
        _
    $region48: #{tpu_custom_call.1} parent=5 // pred_fallthru
      _
    %p552 = scmp.le.s32.totalorder 2, %s13
    // Predicated region
    $region53: #{tpu_custom_call.1} parent=5 // pred_check
      %p553 = pneg %p552
    $region54: #{tpu_custom_call.1} parent=5 // pred_check_branch
      %555 = sbr.rel (%p553) target = $region56
    $region55: #{tpu_custom_call.1} parent=5 // pred_region
      %s556 = ssub.s32 %s13, 2
      // Predicated region
      $region57: #{tpu_custom_call.1} parent=55 // pred_check
        %p557 = pneg %p194
      $region58: #{tpu_custom_call.1} parent=55 // pred_check_branch
        %559 = sbr.rel (%p557) target = $region60
      $region59: #{tpu_custom_call.1} parent=55 // pred_region
        %s560 = smul.u32 8, %s19
        %p561 = scmp.lt.s32.totalorder %s560, 31
        %s562 = scalar_select %p561, %s560, 31
        %s563 = smul.addr %s562, 8
        %s564 = scalar_lea.vmem %s7, %s563
      $region60: #{tpu_custom_call.1} parent=55 // pred_fallthru
        _
    $region56: #{tpu_custom_call.1} parent=5 // pred_fallthru
      _
  $region6: #{tpu_custom_call.1} parent=0 // loop_footer
    %s17 = sadd.s32 1, %s13
  $region7: #{tpu_custom_call.1} parent=0 // loop_footer_branch
    %12 = sbr.rel target = $region3
  $region8: #{tpu_custom_call.1} parent=0 // loop_exit
    _

</llo_original>
